<compile_context>
chip_gen: v6e
topology: v6e:2x2x1
jax: 0.10.0
libtpu: 0.0.40
codegen_flags: <defaults>
</compile_context>

<pallas_src>
import jax
import jax.numpy as jnp
from jax.experimental import pallas as pl
from jax.experimental.pallas import tpu as pltpu

EMB_DIM = 128          # embedding_dim
HIDDEN = 128           # hidden.out_features
SEQ_LEN = 6            # 6 * 128 = 768 = hidden.in_features


def dependency_model_kernel(ids_ref, t_ref, b1_ref, w2_ref, b2_ref, out_ref):
    ids = ids_ref[...]                       # (TB, L) int32
    TB, L = ids.shape
    LV, H = t_ref.shape                      # (L*V, H) folded emb@W1 table
    V = LV // L

    # Concatenated one-hot over (position, vocab):
    #   onehot[b, l*V + v] = (ids[b, l] == v)
    # built as a boolean OR over L lane-broadcast compares (VPU only), cast to
    # the matmul dtype once.  Positions occupy disjoint lane ranges so the OR
    # is exact.
    iota_lv = jax.lax.broadcasted_iota(jnp.int32, (TB, LV), 1)
    match = iota_lv == ids[:, 0:1]                              # l = 0
    for l in range(1, L):                                       # static unroll
        match = jnp.logical_or(match, iota_lv == ids[:, l:l + 1] + l * V)
    onehot = match.astype(t_ref.dtype)                          # exact 0/1

    # Hidden pre-activation: ONE matmul against the folded (emb @ W1) table,
    # f32 accumulation on the MXU.
    acc = jnp.dot(onehot, t_ref[...],
                  preferred_element_type=jnp.float32)           # (TB, H) f32

    # bias + ReLU once, in f32.
    h = jnp.maximum(acc + b1_ref[...], 0.0)                     # (TB, H)

    # Output layer; O pre-padded to a lane-dense multiple of 128 -> unmasked vst.
    logits = jnp.dot(h.astype(w2_ref.dtype), w2_ref[...],
                     preferred_element_type=jnp.float32)        # (TB, O_pad)
    out_ref[...] = (logits + b2_ref[...]).astype(out_ref.dtype)


def dependency_model_forward(ids, emb, w1, b1, w2, b2,
                             *, compute_dtype=jnp.bfloat16, batch_block=256):
    """Forward pass of DependencyModel.

    ids : (B, L) int32 token ids, L * emb_dim must equal w1.shape[0]
    emb : (V, D)        embedding table
    w1  : (L*D, H)      == torch hidden.weight.T
    b1  : (H,)          hidden bias
    w2  : (H, O)        == torch output.weight.T
    b2  : (O,)          output bias
    returns (B, O) float32 logits
    """
    B, L = ids.shape
    V, D = emb.shape
    H = w1.shape[1]
    O = w2.shape[1]
    assert w1.shape[0] == L * D
    LV = L * V

    # --- lane-dense output padding (multiple of 128) ---
    O_pad = pl.cdiv(O, 128) * 128

    # --- batch tiling: sublane multiple of 8; default 256-row blocks to fill
    #     the MXU M dim; guarantee >=2 grid blocks when B >= 16 so both v7x
    #     TensorCores get sharded work. ---
    B8 = pl.cdiv(B, 8) * 8
    TB = min(batch_block, B8)
    if B8 >= 16 and B8 // TB < 2:
        TB = pl.cdiv(B8 // 2, 8) * 8
    B_pad = pl.cdiv(B8, TB) * TB

    # --- static (weight-only) preprocessing: free, amortized across calls ---
    # Fold the embedding into the first Linear:  T[l*V + v] = emb[v] @ W1[l].
    w1_r = w1.reshape(L, D, H)
    t_all = jnp.einsum("vd,ldh->lvh", emb, w1_r)                # f32 fold
    t_all = t_all.reshape(LV, H).astype(compute_dtype)          # (L*V, H)

    ids_p = jnp.pad(ids, ((0, B_pad - B), (0, 0)))              # pad rows -> id 0
    b1_r = b1.reshape(1, H).astype(jnp.float32)                 # (1, H)
    w2_p = jnp.pad(w2, ((0, 0), (0, O_pad - O))).astype(compute_dtype)     # (H, O_pad)
    b2_p = jnp.pad(b2.reshape(1, O),
                   ((0, 0), (0, O_pad - O))).astype(jnp.float32)           # (1, O_pad)

    grid = (B_pad // TB,)
    out = pl.pallas_call(
        dependency_model_kernel,
        out_shape=jax.ShapeDtypeStruct((B_pad, O_pad), jnp.float32),
        grid_spec=pltpu.PrefetchScalarGridSpec(
            num_scalar_prefetch=0,
            grid=grid,
            in_specs=[
                pl.BlockSpec((TB, L), lambda i: (i, 0)),         # ids
                pl.BlockSpec((LV, H), lambda i: (0, 0)),         # folded table (resident)
                pl.BlockSpec((1, H), lambda i: (0, 0)),          # b1
                pl.BlockSpec((H, O_pad), lambda i: (0, 0)),      # w2 (padded, resident)
                pl.BlockSpec((1, O_pad), lambda i: (0, 0)),      # b2 (padded)
            ],
            out_specs=pl.BlockSpec((TB, O_pad), lambda i: (i, 0)),
        ),
        compiler_params=pltpu.CompilerParams(
            dimension_semantics=("parallel",)),                  # megacore sharding
    )(ids_p, t_all, b1_r, w2_p, b2_p)

    return out[:B, :O]


def reference_forward(ids, emb, w1, b1, w2, b2):
    embedded = jnp.take(emb, ids, axis=0)               # (B, L, D)
    flattened = embedded.reshape(ids.shape[0], -1)      # (B, 768)
    hidden = jax.nn.relu(flattened @ w1 + b1)           # (B, 128)
    return hidden @ w2 + b2                             # (B, O)


if __name__ == "__main__":
    # Small, deterministic example shapes.
    B = 8            # batch
    V = 32           # word_types
    O = 16           # outputs
    L = SEQ_LEN      # 6 tokens -> 6 * 128 = 768 features

    key = jax.random.PRNGKey(0)
    k_ids, k_emb, k_w1, k_b1, k_w2, k_b2, k_ids2 = jax.random.split(key, 7)

    ids = jax.random.randint(k_ids, (B, L), 0, V, dtype=jnp.int32)
    emb = jax.random.normal(k_emb, (V, EMB_DIM), dtype=jnp.float32) * 0.1
    # torch Linear stores weight as (out, in); we store the transpose (in, out).
    w1 = jax.random.normal(k_w1, (L * EMB_DIM, HIDDEN), dtype=jnp.float32) * 0.05
    b1 = jax.random.normal(k_b1, (HIDDEN,), dtype=jnp.float32) * 0.05
    w2 = jax.random.normal(k_w2, (HIDDEN, O), dtype=jnp.float32) * 0.05
    b2 = jax.random.normal(k_b2, (O,), dtype=jnp.float32) * 0.05

    ref = reference_forward(ids, emb, w1, b1, w2, b2)

    # 1) f32 path: validates the fold + no-reshape structure against the reference.
    out_f32 = dependency_model_forward(ids, emb, w1, b1, w2, b2,
                                       compute_dtype=jnp.float32)
    out_f32 = jax.block_until_ready(out_f32)
    assert out_f32.shape == (B, O)
    assert jnp.allclose(out_f32, ref, atol=1e-4, rtol=1e-4)

    # 2) bf16 perf path (default): bf16 operands, f32 MXU accumulation.
    out_bf16 = dependency_model_forward(ids, emb, w1, b1, w2, b2)
    out_bf16 = jax.block_until_ready(out_bf16)
    assert out_bf16.shape == (B, O)
    assert jnp.allclose(out_bf16, ref, atol=2e-2, rtol=2e-2)

    # 3) Multi-block path: B >= 16 exercises batch padding + >=2 grid blocks.
    B2 = 20
    ids2 = jax.random.randint(k_ids2, (B2, L), 0, V, dtype=jnp.int32)
    ref2 = reference_forward(ids2, emb, w1, b1, w2, b2)
    out2 = dependency_model_forward(ids2, emb, w1, b1, w2, b2,
                                    compute_dtype=jnp.float32)
    out2 = jax.block_until_ready(out2)
    assert out2.shape == (B2, O)
    assert jnp.allclose(out2, ref2, atol=1e-4, rtol=1e-4)

    print("KERNEL_OK")
</pallas_src>

<mosaic_0001>
module attributes {stable_mosaic.version = 11 : i64} {
  func.func @dependency_model_kernel(%arg0: i32, %arg1: memref<8x6xi32, #tpu.memory_space<vmem>>, %arg2: memref<192x128xf32, #tpu.memory_space<vmem>>, %arg3: memref<1x128xf32, #tpu.memory_space<vmem>>, %arg4: memref<128x128xf32, #tpu.memory_space<vmem>>, %arg5: memref<1x128xf32, #tpu.memory_space<vmem>>, %arg6: memref<8x128xf32, #tpu.memory_space<vmem>>) attributes {dimension_semantics = [#tpu.dimension_semantics<parallel>], iteration_bounds = array<i64: 1>, scalar_prefetch = 0 : i64, scratch_operands = 0 : i64, tpu.core_type = #tpu.core_type<tc>, window_params = [{transform_indices = @transform_0, window_bounds = array<i64: 8, 6>}, {pipeline_mode = #tpu.pipeline_mode<synchronous>, transform_indices = @transform_1, window_bounds = array<i64: 192, 128>}, {pipeline_mode = #tpu.pipeline_mode<synchronous>, transform_indices = @transform_2, window_bounds = array<i64: 1, 128>}, {pipeline_mode = #tpu.pipeline_mode<synchronous>, transform_indices = @transform_3, window_bounds = array<i64: 128, 128>}, {pipeline_mode = #tpu.pipeline_mode<synchronous>, transform_indices = @transform_4, window_bounds = array<i64: 1, 128>}, {transform_indices = @transform_5, window_bounds = array<i64: 8, 128>}]} {
    %c0 = arith.constant 0 : index
    %c0_0 = arith.constant 0 : index
    %0 = vector.load %arg1[%c0, %c0_0] : memref<8x6xi32, #tpu.memory_space<vmem>>, vector<8x6xi32>
    %1 = tpu.iota {dimensions = array<i32: 1>} : vector<8x192xi32>
    %2 = vector.extract_strided_slice %0 {offsets = [0, 0], sizes = [8, 1], strides = [1, 1]} : vector<8x6xi32> to vector<8x1xi32>
    %3 = vector.broadcast %2 : vector<8x1xi32> to vector<8x192xi32>
    %4 = arith.cmpi eq, %1, %3 : vector<8x192xi32>
    %5 = vector.extract_strided_slice %0 {offsets = [0, 1], sizes = [8, 1], strides = [1, 1]} : vector<8x6xi32> to vector<8x1xi32>
    %c32_i32 = arith.constant 32 : i32
    %6 = vector.broadcast %c32_i32 : i32 to vector<8x1xi32>
    %7 = arith.addi %5, %6 : vector<8x1xi32>
    %8 = vector.broadcast %7 : vector<8x1xi32> to vector<8x192xi32>
    %9 = arith.cmpi eq, %1, %8 : vector<8x192xi32>
    %10 = arith.ori %4, %9 : vector<8x192xi1>
    %11 = vector.extract_strided_slice %0 {offsets = [0, 2], sizes = [8, 1], strides = [1, 1]} : vector<8x6xi32> to vector<8x1xi32>
    %c64_i32 = arith.constant 64 : i32
    %12 = vector.broadcast %c64_i32 : i32 to vector<8x1xi32>
    %13 = arith.addi %11, %12 : vector<8x1xi32>
    %14 = vector.broadcast %13 : vector<8x1xi32> to vector<8x192xi32>
    %15 = arith.cmpi eq, %1, %14 : vector<8x192xi32>
    %16 = arith.ori %10, %15 : vector<8x192xi1>
    %17 = vector.extract_strided_slice %0 {offsets = [0, 3], sizes = [8, 1], strides = [1, 1]} : vector<8x6xi32> to vector<8x1xi32>
    %c96_i32 = arith.constant 96 : i32
    %18 = vector.broadcast %c96_i32 : i32 to vector<8x1xi32>
    %19 = arith.addi %17, %18 : vector<8x1xi32>
    %20 = vector.broadcast %19 : vector<8x1xi32> to vector<8x192xi32>
    %21 = arith.cmpi eq, %1, %20 : vector<8x192xi32>
    %22 = arith.ori %16, %21 : vector<8x192xi1>
    %23 = vector.extract_strided_slice %0 {offsets = [0, 4], sizes = [8, 1], strides = [1, 1]} : vector<8x6xi32> to vector<8x1xi32>
    %c128_i32 = arith.constant 128 : i32
    %24 = vector.broadcast %c128_i32 : i32 to vector<8x1xi32>
    %25 = arith.addi %23, %24 : vector<8x1xi32>
    %26 = vector.broadcast %25 : vector<8x1xi32> to vector<8x192xi32>
    %27 = arith.cmpi eq, %1, %26 : vector<8x192xi32>
    %28 = arith.ori %22, %27 : vector<8x192xi1>
    %29 = vector.extract_strided_slice %0 {offsets = [0, 5], sizes = [8, 1], strides = [1, 1]} : vector<8x6xi32> to vector<8x1xi32>
    %c160_i32 = arith.constant 160 : i32
    %30 = vector.broadcast %c160_i32 : i32 to vector<8x1xi32>
    %31 = arith.addi %29, %30 : vector<8x1xi32>
    %32 = vector.broadcast %31 : vector<8x1xi32> to vector<8x192xi32>
    %33 = arith.cmpi eq, %1, %32 : vector<8x192xi32>
    %34 = arith.ori %28, %33 : vector<8x192xi1>
    %35 = arith.extui %34 : vector<8x192xi1> to vector<8x192xi32>
    %36 = arith.sitofp %35 : vector<8x192xi32> to vector<8x192xf32>
    %c0_1 = arith.constant 0 : index
    %c0_2 = arith.constant 0 : index
    %37 = vector.load %arg2[%c0_1, %c0_2] : memref<192x128xf32, #tpu.memory_space<vmem>>, vector<192x128xf32>
    %cst = arith.constant dense<0.000000e+00> : vector<8x128xf32>
    %38 = tpu.matmul %36, %37, %cst {dimension_numbers = #tpu.dot_dimension_numbers<[1], [0], [0], [1], [0, 0, 1, 1], [], []>} : vector<8x192xf32>, vector<192x128xf32>, vector<8x128xf32> -> vector<8x128xf32>
    %c0_3 = arith.constant 0 : index
    %c0_4 = arith.constant 0 : index
    %39 = vector.load %arg3[%c0_3, %c0_4] : memref<1x128xf32, #tpu.memory_space<vmem>>, vector<1x128xf32>
    %40 = vector.broadcast %39 : vector<1x128xf32> to vector<8x128xf32>
    %41 = arith.addf %38, %40 : vector<8x128xf32>
    %cst_5 = arith.constant 0.000000e+00 : f32
    %42 = vector.broadcast %cst_5 : f32 to vector<8x128xf32>
    %43 = arith.maximumf %41, %42 : vector<8x128xf32>
    %c0_6 = arith.constant 0 : index
    %c0_7 = arith.constant 0 : index
    %44 = vector.load %arg4[%c0_6, %c0_7] : memref<128x128xf32, #tpu.memory_space<vmem>>, vector<128x128xf32>
    %cst_8 = arith.constant dense<0.000000e+00> : vector<8x128xf32>
    %45 = tpu.matmul %43, %44, %cst_8 {dimension_numbers = #tpu.dot_dimension_numbers<[1], [0], [0], [1], [0, 0, 1, 1], [], []>} : vector<8x128xf32>, vector<128x128xf32>, vector<8x128xf32> -> vector<8x128xf32>
    %c0_9 = arith.constant 0 : index
    %c0_10 = arith.constant 0 : index
    %46 = vector.load %arg5[%c0_9, %c0_10] : memref<1x128xf32, #tpu.memory_space<vmem>>, vector<1x128xf32>
    %47 = vector.broadcast %46 : vector<1x128xf32> to vector<8x128xf32>
    %48 = arith.addf %45, %47 : vector<8x128xf32>
    %c0_11 = arith.constant 0 : index
    %c0_12 = arith.constant 0 : index
    %49 = vector.load %arg6[%c0_11, %c0_12] : memref<8x128xf32, #tpu.memory_space<vmem>>, vector<8x128xf32>
    tpu.vector_store %arg6[%c0_11, %c0_12], %48 {strides = array<i32>} : memref<8x128xf32, #tpu.memory_space<vmem>>, vector<8x128xf32>,
    return
  }
  func.func @transform_0(%arg0: i32) -> (i32, i32) {
    %c0_i32 = arith.constant 0 : i32
    %c0_i32_0 = arith.constant 0 : i32
    return %arg0, %c0_i32 : i32, i32
  }
  func.func @transform_1(%arg0: i32) -> (i32, i32) {
    %c0_i32 = arith.constant 0 : i32
    %c0_i32_0 = arith.constant 0 : i32
    %c0_i32_1 = arith.constant 0 : i32
    return %c0_i32, %c0_i32_0 : i32, i32
  }
  func.func @transform_2(%arg0: i32) -> (i32, i32) {
    %c0_i32 = arith.constant 0 : i32
    %c0_i32_0 = arith.constant 0 : i32
    %c0_i32_1 = arith.constant 0 : i32
    return %c0_i32, %c0_i32_0 : i32, i32
  }
  func.func @transform_3(%arg0: i32) -> (i32, i32) {
    %c0_i32 = arith.constant 0 : i32
    %c0_i32_0 = arith.constant 0 : i32
    %c0_i32_1 = arith.constant 0 : i32
    return %c0_i32, %c0_i32_0 : i32, i32
  }
  func.func @transform_4(%arg0: i32) -> (i32, i32) {
    %c0_i32 = arith.constant 0 : i32
    %c0_i32_0 = arith.constant 0 : i32
    %c0_i32_1 = arith.constant 0 : i32
    return %c0_i32, %c0_i32_0 : i32, i32
  }
  func.func @transform_5(%arg0: i32) -> (i32, i32) {
    %c0_i32 = arith.constant 0 : i32
    %c0_i32_0 = arith.constant 0 : i32
    return %arg0, %c0_i32 : i32, i32
  }
}

</mosaic_0001>

<llo_original>
// kernel: tpu_custom_call.1
$region0: #{tpu_custom_call.1}
  #allocation0 [shape = 'u32[]', space=smem, size = 0x4, offset = 0x4, fixed_abs, tag = 'smem constant byte address 0x4 - core index']
  #allocation1 [shape = 'u32[144,128]{1,0:T(1,128)}', space=vmem, size = 0x12000, scoped, tag = 'internal scratch']
  %s0 = inlined_call_operand.hbm [shape: s32[8,6], index: 0, kind: input, shape index: {}]
  %s1 = inlined_call_operand.hbm [shape: f32[192,128], index: 1, kind: input, shape index: {}]
  %s2 = inlined_call_operand.vmem [shape: f32[1,128], index: 2, kind: input, shape index: {}]
  %s3 = inlined_call_operand.hbm [shape: f32[128,128], index: 3, kind: input, shape index: {}]
  %s4 = inlined_call_operand.vmem [shape: f32[1,128], index: 4, kind: input, shape index: {}]
  %s5 = inlined_call_operand.hbm [shape: f32[8,128], index: 5, kind: output, shape index: {}]
  %s6 = sld [smem:[#allocation0]]
  $region42: #{tpu_custom_call.1} parent=0
    _
  %s8 = ssub.s32 1, %s6
  %s9 = scalar_select 0, %s8, %s6
  $region1: #{tpu_custom_call.1} parent=0
    #allocation2 [shape = 'u8[4096]{0}', space=vmem, size = 0x1000, scoped, tag = 'input window, operand 0, single buffered']
    #allocation3 [shape = 's32[1]{0}', space=sflag, size = 0x4, scoped, tag = 'scoped memory for tpu_custom_call.1']
    #allocation4 [shape = 's32[1]{0}', space=sflag, size = 0x4, scoped, tag = 'scoped memory for tpu_custom_call.1']
    #allocation5 [shape = 'u8[98304]{0}', space=vmem, size = 0x18000, scoped, tag = 'input window, operand 1, single buffered']
    #allocation6 [shape = 's32[1]{0}', space=sflag, size = 0x4, scoped, tag = 'scoped memory for tpu_custom_call.1']
    #allocation7 [shape = 'u8[65536]{0}', space=vmem, size = 0x10000, scoped, tag = 'input window, operand 3, single buffered']
    #allocation8 [shape = 'u8[4096]{0}', space=vmem, size = 0x1000, scoped, tag = 'output window, operand 0, single buffered']
    %10 = vsyncpa [#allocation3], 0
    %11 = vsyncpa [#allocation6], 0
    %12 = vsyncpa [#allocation4], 0
    // Predicated region
    $region2: #{tpu_custom_call.1} parent=1 // pred_check
      _
    $region3: #{tpu_custom_call.1} parent=1 // pred_check_branch
      %14 = sbr.rel (0) target = $region5
    $region4: #{tpu_custom_call.1} parent=1 // pred_region
      %s16 = ssub.s32 128, 128
      %17 = vsyncadd [#allocation3], %s16
      %s19 = sshll.u32 [#allocation2], 4
      %s20 = int_to_ptr.vmem [resolvable:$true] %s19
      %22 = dma.hbm_to_vmem [thread:$0]  %s0, 128, %s20, [#allocation3]
    $region5: #{tpu_custom_call.1} parent=1 // pred_fallthru
      _
    // Predicated region
    $region6: #{tpu_custom_call.1} parent=1 // pred_check
      _
    $region7: #{tpu_custom_call.1} parent=1 // pred_check_branch
      %24 = sbr.rel (0) target = $region9
    $region8: #{tpu_custom_call.1} parent=1 // pred_region
      %s26 = ssub.s32 3072, 3072
      %27 = vsyncadd [#allocation6], %s26
      %s28 = sshll.u32 [#allocation5], 4
      %s29 = int_to_ptr.vmem [resolvable:$true] %s28
      %34 = dma.hbm_to_vmem [thread:$0]  %s1, 3072, %s29, [#allocation6], 128, 128, 8
    $region9: #{tpu_custom_call.1} parent=1 // pred_fallthru
      _
    // Predicated region
    $region10: #{tpu_custom_call.1} parent=1 // pred_check
      _
    $region11: #{tpu_custom_call.1} parent=1 // pred_check_branch
      %36 = sbr.rel (0) target = $region13
    $region12: #{tpu_custom_call.1} parent=1 // pred_region
      _
    $region13: #{tpu_custom_call.1} parent=1 // pred_fallthru
      _
    // Predicated region
    $region14: #{tpu_custom_call.1} parent=1 // pred_check
      _
    $region15: #{tpu_custom_call.1} parent=1 // pred_check_branch
      %38 = sbr.rel (0) target = $region17
    $region16: #{tpu_custom_call.1} parent=1 // pred_region
      %s40 = ssub.s32 2048, 2048
      %41 = vsyncadd [#allocation6], %s40
      %s42 = sshll.u32 [#allocation7], 4
      %s43 = int_to_ptr.vmem [resolvable:$true] %s42
      %48 = dma.hbm_to_vmem [thread:$0]  %s3, 2048, %s43, [#allocation6], 128, 128, 8
    $region17: #{tpu_custom_call.1} parent=1 // pred_fallthru
      _
    // Predicated region
    $region18: #{tpu_custom_call.1} parent=1 // pred_check
      _
    $region19: #{tpu_custom_call.1} parent=1 // pred_check_branch
      %50 = sbr.rel (0) target = $region21
    $region20: #{tpu_custom_call.1} parent=1 // pred_region
      _
    $region21: #{tpu_custom_call.1} parent=1 // pred_fallthru
      _
    // Predicated region
    $region22: #{tpu_custom_call.1} parent=1 // pred_check
      _
    $region23: #{tpu_custom_call.1} parent=1 // pred_check_branch
      %52 = sbr.rel (0) target = $region25
    $region24: #{tpu_custom_call.1} parent=1 // pred_region
      %53 = dma.done [#allocation3], 128
    $region25: #{tpu_custom_call.1} parent=1 // pred_fallthru
      _
    // Predicated region
    $region26: #{tpu_custom_call.1} parent=1 // pred_check
      _
    $region27: #{tpu_custom_call.1} parent=1 // pred_check_branch
      %55 = sbr.rel (0) target = $region29
    $region28: #{tpu_custom_call.1} parent=1 // pred_region
      %56 = dma.done [#allocation6], 3072
    $region29: #{tpu_custom_call.1} parent=1 // pred_fallthru
      _
    // Predicated region
    $region30: #{tpu_custom_call.1} parent=1 // pred_check
      _
    $region31: #{tpu_custom_call.1} parent=1 // pred_check_branch
      %58 = sbr.rel (0) target = $region33
    $region32: #{tpu_custom_call.1} parent=1 // pred_region
      %59 = dma.done [#allocation6], 2048
    $region33: #{tpu_custom_call.1} parent=1 // pred_fallthru
      _
    %v60 = vld [vmem:[#allocation2] sm:$0xff]
    %v61 = vlaneseq
    %v62 = vand.u32 %v61, 127
    %v63 = vadd.s32 %v62, 128
    %64 = vset.pattern.permute.xlu0 0
    %65 = vperm.xlu0 %64, %v60
    %v66 = vpop.permute.xlu0 %65
    %vm67 = vcmp.eq.s32.totalorder %v62, %v66
    %vm68 = vcmp.eq.s32.totalorder %v63, %v66
    %v69 = vadd.s32 %v60, 32
    %70 = vset.pattern.permute.xlu0 1
    %71 = vperm.xlu0 %70, %v69
    %v72 = vpop.permute.xlu0 %71
    %vm73 = vcmp.eq.s32.totalorder %v62, %v72
    %vm74 = vcmp.eq.s32.totalorder %v63, %v72
    %vm75 = vmor %vm67, %vm73
    %vm76 = vmor %vm68, %vm74
    %v77 = vadd.s32 %v60, 64
    %78 = vset.pattern.permute.xlu0 2
    %79 = vperm.xlu0 %78, %v77
    %v80 = vpop.permute.xlu0 %79
    %vm81 = vcmp.eq.s32.totalorder %v62, %v80
    %vm82 = vcmp.eq.s32.totalorder %v63, %v80
    %vm83 = vmor %vm75, %vm81
    %vm84 = vmor %vm76, %vm82
    %v85 = vadd.s32 %v60, 96
    %86 = vset.pattern.permute.xlu0 3
    %87 = vperm.xlu0 %86, %v85
    %v88 = vpop.permute.xlu0 %87
    %vm89 = vcmp.eq.s32.totalorder %v62, %v88
    %vm90 = vcmp.eq.s32.totalorder %v63, %v88
    %vm91 = vmor %vm83, %vm89
    %vm92 = vmor %vm84, %vm90
    %v93 = vadd.s32 %v60, 128
    %94 = vset.pattern.permute.xlu0 4
    %95 = vperm.xlu0 %94, %v93
    %v96 = vpop.permute.xlu0 %95
    %vm97 = vcmp.eq.s32.totalorder %v62, %v96
    %vm98 = vcmp.eq.s32.totalorder %v63, %v96
    %vm99 = vmor %vm91, %vm97
    %vm100 = vmor %vm92, %vm98
    %v101 = vadd.s32 %v60, 160
    %102 = vset.pattern.permute.xlu0 5
    %103 = vperm.xlu0 %102, %v101
    %v104 = vpop.permute.xlu0 %103
    %vm105 = vcmp.eq.s32.totalorder %v62, %v104
    %vm106 = vcmp.eq.s32.totalorder %v63, %v104
    %vm107 = vmor %vm99, %vm105
    %vm108 = vmor %vm100, %vm106
    %v109 = vsel %vm107, 1, 0
    %v110 = vsel %vm108, 1, 0
    %v111 = vcvt.s32.f32 %v109
    %v112 = vcvt.s32.f32 %v110
    %v113 = vld [vmem:[#allocation5] sm:$0xff]
    %v114 = vld [vmem:[#allocation5 + $0x8] sm:$0xff]
    %v115 = vld [vmem:[#allocation5 + $0x10] sm:$0xff]
    %v116 = vld [vmem:[#allocation5 + $0x18] sm:$0xff]
    %v117 = vld [vmem:[#allocation5 + $0x20] sm:$0xff]
    %v118 = vld [vmem:[#allocation5 + $0x28] sm:$0xff]
    %v119 = vld [vmem:[#allocation5 + $0x30] sm:$0xff]
    %v120 = vld [vmem:[#allocation5 + $0x38] sm:$0xff]
    %v121 = vld [vmem:[#allocation5 + $0x40] sm:$0xff]
    %v122 = vld [vmem:[#allocation5 + $0x48] sm:$0xff]
    %v123 = vld [vmem:[#allocation5 + $0x50] sm:$0xff]
    %v124 = vld [vmem:[#allocation5 + $0x58] sm:$0xff]
    %v125 = vld [vmem:[#allocation5 + $0x60] sm:$0xff]
    %v126 = vld [vmem:[#allocation5 + $0x68] sm:$0xff]
    %v127 = vld [vmem:[#allocation5 + $0x70] sm:$0xff]
    %v128 = vld [vmem:[#allocation5 + $0x78] sm:$0xff]
    %v129 = vld [vmem:[#allocation5 + $0x80] sm:$0xff]
    %v130 = vld [vmem:[#allocation5 + $0x88] sm:$0xff]
    %v131 = vld [vmem:[#allocation5 + $0x90] sm:$0xff]
    %v132 = vld [vmem:[#allocation5 + $0x98] sm:$0xff]
    %v133 = vld [vmem:[#allocation5 + $0xa0] sm:$0xff]
    %v134 = vld [vmem:[#allocation5 + $0xa8] sm:$0xff]
    %v135 = vld [vmem:[#allocation5 + $0xb0] sm:$0xff]
    %v136 = vld [vmem:[#allocation5 + $0xb8] sm:$0xff]
    %v137 = vld [vmem:[%s2] sm:$0x1]
    %v139 = vlaneseq
    %v140 = vshrl.u32 %v139, 7
    %v141 = vsub.s32 0, %v140
    %v142 = vrot.slane %v137, %v141
    %vm144 = vcmask 523264
    %v146 = vsel %vm144, %v112, 0
    %148 = vmatprep.subr.mxu0 0.0
    %149 = vmatpush1.msra.mxu0 %v128
    %150 = vmatprep.subr.mxu0 0.0
    %151 = vmatpush1.msra.mxu0 %v127
    %152 = vmatprep.subr.mxu0 0.0
    %153 = vmatpush1.msra.mxu0 %v126
    %154 = vmatprep.subr.mxu0 0.0
    %155 = vmatpush1.msra.mxu0 %v125
    %156 = vmatprep.subr.mxu0 0.0
    %157 = vmatpush1.msra.mxu0 %v124
    %158 = vmatprep.subr.mxu0 0.0
    %159 = vmatpush1.msra.mxu0 %v123
    %160 = vmatprep.subr.mxu0 0.0
    %161 = vmatpush1.msra.mxu0 %v122
    %162 = vmatprep.subr.mxu0 0.0
    %163 = vmatpush1.msra.mxu0 %v121
    %164 = vmatprep.subr.mxu0 0.0
    %165 = vmatpush1.msra.mxu0 %v120
    %166 = vmatprep.subr.mxu0 0.0
    %167 = vmatpush1.msra.mxu0 %v119
    %168 = vmatprep.subr.mxu0 0.0
    %169 = vmatpush1.msra.mxu0 %v118
    %170 = vmatprep.subr.mxu0 0.0
    %171 = vmatpush1.msra.mxu0 %v117
    %172 = vmatprep.subr.mxu0 0.0
    %173 = vmatpush1.msra.mxu0 %v116
    %174 = vmatprep.subr.mxu0 0.0
    %175 = vmatpush1.msra.mxu0 %v115
    %176 = vmatprep.subr.mxu0 0.0
    %177 = vmatpush1.msra.mxu0 %v114
    %178 = vmatprep.subr.mxu0 0.0
    %179 = vmatpush1.msra.mxu0 %v113
    %180 = vmatprep.subr.mxu0 0.0
    %181 = vmatpush2.msra.mxu0 0.0
    %182 = vmatprep.subr.mxu0 0.0
    %183 = vmatpush2.msra.mxu0 0.0
    %184 = vmatprep.subr.mxu0 0.0
    %185 = vmatpush2.msra.mxu0 0.0
    %186 = vmatprep.subr.mxu0 0.0
    %187 = vmatpush2.msra.mxu0 0.0
    %188 = vmatprep.subr.mxu0 0.0
    %189 = vmatpush2.msra.mxu0 0.0
    %190 = vmatprep.subr.mxu0 0.0
    %191 = vmatpush2.msra.mxu0 0.0
    %192 = vmatprep.subr.mxu0 0.0
    %193 = vmatpush2.msra.mxu0 0.0
    %194 = vmatprep.subr.mxu0 0.0
    %195 = vmatpush2.msra.mxu0 0.0
    %196 = vmatprep.subr.mxu0 0.0
    %197 = vmatpush2.msra.mxu0 %v136
    %198 = vmatprep.subr.mxu0 0.0
    %199 = vmatpush2.msra.mxu0 %v135
    %200 = vmatprep.subr.mxu0 0.0
    %201 = vmatpush2.msra.mxu0 %v134
    %202 = vmatprep.subr.mxu0 0.0
    %203 = vmatpush2.msra.mxu0 %v133
    %204 = vmatprep.subr.mxu0 0.0
    %205 = vmatpush2.msra.mxu0 %v132
    %206 = vmatprep.subr.mxu0 0.0
    %207 = vmatpush2.msra.mxu0 %v131
    %208 = vmatprep.subr.mxu0 0.0
    %209 = vmatpush2.msra.mxu0 %v130
    %210 = vmatprep.subr.mxu0 0.0
    %211 = vmatpush2.msra.mxu0 %v129
    %212 = vmatprep.mubr.f32.mxu0 %v146
    %213 = vmatmul.mubr.f32.gmra.mxu0 %v111
    %v214 = vpop.f32.mrf.mxu0
    %v215 = vadd.f32 %v142, %v214
    %v216 = vpop.f32.mrf.mxu0
    %217 = vdwg.mxu0
    %v218 = vmax.f32 %v215, 0.0
    %v219 = vld [vmem:[#allocation7] sm:$0xff]
    %v220 = vld [vmem:[#allocation7 + $0x8] sm:$0xff]
    %v221 = vld [vmem:[#allocation7 + $0x10] sm:$0xff]
    %v222 = vld [vmem:[#allocation7 + $0x18] sm:$0xff]
    %v223 = vld [vmem:[#allocation7 + $0x20] sm:$0xff]
    %v224 = vld [vmem:[#allocation7 + $0x28] sm:$0xff]
    %v225 = vld [vmem:[#allocation7 + $0x30] sm:$0xff]
    %v226 = vld [vmem:[#allocation7 + $0x38] sm:$0xff]
    %v227 = vld [vmem:[#allocation7 + $0x40] sm:$0xff]
    %v228 = vld [vmem:[#allocation7 + $0x48] sm:$0xff]
    %v229 = vld [vmem:[#allocation7 + $0x50] sm:$0xff]
    %v230 = vld [vmem:[#allocation7 + $0x58] sm:$0xff]
    %v231 = vld [vmem:[#allocation7 + $0x60] sm:$0xff]
    %v232 = vld [vmem:[#allocation7 + $0x68] sm:$0xff]
    %v233 = vld [vmem:[#allocation7 + $0x70] sm:$0xff]
    %v234 = vld [vmem:[#allocation7 + $0x78] sm:$0xff]
    %v235 = vld [vmem:[%s4] sm:$0x1]
    %v237 = vlaneseq
    %v238 = vshrl.u32 %v237, 7
    %v239 = vsub.s32 0, %v238
    %v240 = vrot.slane %v235, %v239
    %242 = vmatprep.subr.mxu0 0.0
    %243 = vmatpush1.msra.mxu0 %v234
    %244 = vmatprep.subr.mxu0 0.0
    %245 = vmatpush1.msra.mxu0 %v233
    %246 = vmatprep.subr.mxu0 0.0
    %247 = vmatpush1.msra.mxu0 %v232
    %248 = vmatprep.subr.mxu0 0.0
    %249 = vmatpush1.msra.mxu0 %v231
    %250 = vmatprep.subr.mxu0 0.0
    %251 = vmatpush1.msra.mxu0 %v230
    %252 = vmatprep.subr.mxu0 0.0
    %253 = vmatpush1.msra.mxu0 %v229
    %254 = vmatprep.subr.mxu0 0.0
    %255 = vmatpush1.msra.mxu0 %v228
    %256 = vmatprep.subr.mxu0 0.0
    %257 = vmatpush1.msra.mxu0 %v227
    %258 = vmatprep.subr.mxu0 0.0
    %259 = vmatpush1.msra.mxu0 %v226
    %260 = vmatprep.subr.mxu0 0.0
    %261 = vmatpush1.msra.mxu0 %v225
    %262 = vmatprep.subr.mxu0 0.0
    %263 = vmatpush1.msra.mxu0 %v224
    %264 = vmatprep.subr.mxu0 0.0
    %265 = vmatpush1.msra.mxu0 %v223
    %266 = vmatprep.subr.mxu0 0.0
    %267 = vmatpush1.msra.mxu0 %v222
    %268 = vmatprep.subr.mxu0 0.0
    %269 = vmatpush1.msra.mxu0 %v221
    %270 = vmatprep.subr.mxu0 0.0
    %271 = vmatpush1.msra.mxu0 %v220
    %272 = vmatprep.subr.mxu0 0.0
    %273 = vmatpush1.msra.mxu0 %v219
    %274 = vmatprep.subr.mxu0 0.0
    %275 = vmatpush2.msra.mxu0 0.0
    %276 = vmatprep.subr.mxu0 0.0
    %277 = vmatpush2.msra.mxu0 0.0
    %278 = vmatprep.subr.mxu0 0.0
    %279 = vmatpush2.msra.mxu0 0.0
    %280 = vmatprep.subr.mxu0 0.0
    %281 = vmatpush2.msra.mxu0 0.0
    %282 = vmatprep.subr.mxu0 0.0
    %283 = vmatpush2.msra.mxu0 0.0
    %284 = vmatprep.subr.mxu0 0.0
    %285 = vmatpush2.msra.mxu0 0.0
    %286 = vmatprep.subr.mxu0 0.0
    %287 = vmatpush2.msra.mxu0 0.0
    %288 = vmatprep.subr.mxu0 0.0
    %289 = vmatpush2.msra.mxu0 0.0
    %290 = vmatprep.subr.mxu0 0.0
    %291 = vmatpush2.msra.mxu0 0.0
    %292 = vmatprep.subr.mxu0 0.0
    %293 = vmatpush2.msra.mxu0 0.0
    %294 = vmatprep.subr.mxu0 0.0
    %295 = vmatpush2.msra.mxu0 0.0
    %296 = vmatprep.subr.mxu0 0.0
    %297 = vmatpush2.msra.mxu0 0.0
    %298 = vmatprep.subr.mxu0 0.0
    %299 = vmatpush2.msra.mxu0 0.0
    %300 = vmatprep.subr.mxu0 0.0
    %301 = vmatpush2.msra.mxu0 0.0
    %302 = vmatprep.subr.mxu0 0.0
    %303 = vmatpush2.msra.mxu0 0.0
    %304 = vmatprep.subr.mxu0 0.0
    %305 = vmatpush2.msra.mxu0 0.0
    %306 = vmatprep.mubr.f32.mxu0 0.0
    %307 = vmatmul.mubr.f32.gmra.mxu0 %v218
    %v308 = vpop.f32.mrf.mxu0
    %v309 = vadd.f32 %v240, %v308
    %v310 = vpop.f32.mrf.mxu0
    %311 = vdwg.mxu0
    %312 = vst [vmem:[#allocation8] sm:$0xff] %v309
    // Predicated region
    $region34: #{tpu_custom_call.1} parent=1 // pred_check
      _
    $region35: #{tpu_custom_call.1} parent=1 // pred_check_branch
      %314 = sbr.rel (0) target = $region37
    $region36: #{tpu_custom_call.1} parent=1 // pred_region
      %s316 = ssub.s32 128, 128
      %317 = vsyncadd [#allocation4], %s316
      %s319 = sshll.u32 [#allocation8], 4
      %s320 = int_to_ptr.vmem [resolvable:$true] %s319
      %322 = dma.vmem_to_hbm [thread:$0]  %s320, 128, %s5, [#allocation4]
    $region37: #{tpu_custom_call.1} parent=1 // pred_fallthru
      _
    // Predicated region
    $region38: #{tpu_custom_call.1} parent=1 // pred_check
      _
    $region39: #{tpu_custom_call.1} parent=1 // pred_check_branch
      %324 = sbr.rel (0) target = $region41
    $region40: #{tpu_custom_call.1} parent=1 // pred_region
      %325 = dma.done [#allocation4], 128
    $region41: #{tpu_custom_call.1} parent=1 // pred_fallthru
      _
    %326 = vsyncpa [#allocation3], 1
    %327 = vsyncpa [#allocation6], 1
    %328 = vsyncpa [#allocation4], 1

</llo_original>
